<compile_context>
chip_gen: v6e
topology: v6e:2x2x1
jax: 0.10.0
libtpu: 0.0.40
codegen_flags: <defaults>
</compile_context>

<pallas_src>
import jax
import jax.numpy as jnp
from jax.experimental import pallas as pl
from jax.experimental.pallas import tpu as pltpu


def _cdiv(a, b):
    return -(-a // b)


def _tpu_info():
    try:
        return pltpu.get_tpu_info()
    except Exception:
        return None


def _vmem_capacity_bytes():
    info = _tpu_info()
    v = getattr(info, "vmem_capacity_bytes", None) if info is not None else None
    if isinstance(v, int) and v > 0:
        return v
    return 128 << 20  # fallback (v5e/v6e class); v7x reports its own 64 MiB


def _guess_num_tensorcores():
    info = _tpu_info()
    if info is not None:
        for attr in ("num_tensorcores", "tensorcore_count", "num_cores", "core_count"):
            v = getattr(info, attr, None)
            if isinstance(v, int) and 1 <= v <= 8:
                return v
    # Unknown: 2 shards is what v7x needs; on single-TC parts the extra
    # parallel axis is just a 2-long outer loop (near-zero cost).
    return 2


def _row_align(itemsize):
    if itemsize >= 4:
        return 8
    if itemsize == 2:
        return 16   # bf16 packs 16 rows / sublane tile
    return 32       # int8 / fp8


def _pick_tile_n(n, c, itemsize, vmem_cap):
    align = _row_align(itemsize)
    in_row = c * itemsize
    f32_row = c * 4
    # Live footprint per tile row: double-buffered input block + ~3 tile-sized
    # f32 intermediates (upcast x, exp, p).
    per_row = 2 * in_row + 3 * f32_row

    total_budget = max(int(0.60 * vmem_cap) - (4 << 20), 4 << 20)
    # Cap the raw input block per generation: big tiles on 128 MiB parts,
    # smaller on 64 MiB (v7x) parts.
    block_cap = (24 << 20) if vmem_cap >= (96 << 20) else (10 << 20)

    t = min(total_budget // per_row, block_cap // max(1, in_row), n)
    t = max(align, (int(t) // align) * align)  # multiple of 8 needed for the fold
    return int(t)


def _make_kernel(n_total, tile_n, tiles_per_shard, c, has_ragged):
    def kernel(x_ref, o_ref):
        s = pl.program_id(0)   # shard (parallel axis -> megacore sharding)
        t = pl.program_id(1)   # batch tile within shard (reduction axis)

        @pl.when(t == 0)
        def _init():
            o_ref[...] = jnp.zeros_like(o_ref)

        # Stream the (tile_n, c) logits tile; upcast to f32 for the math.
        x = x_ref[...].astype(jnp.float32)

        # Numerically-stable softmax along the class (lane) axis.
        m = jnp.max(x, axis=1, keepdims=True)
        e = jnp.exp(x - m)
        inv = pl.reciprocal(jnp.sum(e, axis=1, keepdims=True), approx=True)
        p = e * inv                                           # (tile_n, c)

        if not has_ragged:
            # Fast path: every tile is full -> no per-element masking at all.
            o_ref[...] += jnp.sum(p.reshape(tile_n // 8, 8, c), axis=0)
        else:
            tile_start = (s * tiles_per_shard + t) * tile_n
            ragged = tile_start + tile_n > n_total

            @pl.when(jnp.logical_not(ragged))
            def _full():
                o_ref[...] += jnp.sum(p.reshape(tile_n // 8, 8, c), axis=0)

            @pl.when(ragged)
            def _tail():
                # Rows past the true batch size (block overhang / clamped
                # duplicate tiles) may hold garbage; the select zeroes them
                # (softmax is purely row-wise, so garbage can't leak across).
                row = jax.lax.broadcasted_iota(jnp.int32, (tile_n, 1), 0) + tile_start
                pm = jnp.where(row < n_total, p, 0.0)
                o_ref[...] += jnp.sum(pm.reshape(tile_n // 8, 8, c), axis=0)

    return kernel


def class_balance_loss(logits, tile_n=None):
    """Pallas implementation of ClassBalanceLoss: logits (N, C) -> scalar f32."""
    n, c = logits.shape
    itemsize = jnp.dtype(logits.dtype).itemsize
    vmem_cap = _vmem_capacity_bytes()

    if tile_n is None:
        tile_n = _pick_tile_n(n, c, itemsize, vmem_cap)
    else:
        tile_n = max(8, (int(tile_n) // 8) * 8)   # the sublane fold needs a multiple of 8

    n_tiles = _cdiv(n, tile_n)
    num_shards = max(1, min(_guess_num_tensorcores(), n_tiles))
    tiles_per_shard = _cdiv(n_tiles, num_shards)
    total_tiles = num_shards * tiles_per_shard
    has_ragged = (total_tiles * tile_n) != n
    last_tile = n_tiles - 1

    def in_map(s, t):
        # Clamp so over-provisioned shards re-read the last real tile; their
        # contribution is fully masked out inside the kernel.
        return (jnp.minimum(s * tiles_per_shard + t, last_tile), 0)

    block_bytes = tile_n * c * itemsize
    f32_tile = tile_n * c * 4
    out_bytes = num_shards * 8 * c * 4
    need = 2 * block_bytes + 3 * f32_tile + 2 * out_bytes + (4 << 20)
    vmem_limit = int(min(max(need, 16 << 20), int(0.85 * vmem_cap)))

    cost = pl.CostEstimate(
        flops=5 * n * c,
        transcendentals=n * c,                      # exp over (N, C); log is in the wrapper
        bytes_accessed=n * c * itemsize + out_bytes,
    )

    partial = pl.pallas_call(
        _make_kernel(n, tile_n, tiles_per_shard, c, has_ragged),
        out_shape=jax.ShapeDtypeStruct((num_shards * 8, c), jnp.float32),
        grid=(num_shards, tiles_per_shard),
        in_specs=[pl.BlockSpec((tile_n, c), in_map)],
        out_specs=pl.BlockSpec((8, c), lambda s, t: (s, 0)),
        compiler_params=pltpu.CompilerParams(
            dimension_semantics=("parallel", "arbitrary"),
            vmem_limit_bytes=vmem_limit,
        ),
        cost_estimate=cost,
    )(logits)

    # Finalize: collapse shard/sublane partial sums, mean over batch, eps,
    # log, mean over classes, negate.
    mean_p = jnp.sum(partial, axis=0) / jnp.float32(n)
    return -jnp.mean(jnp.log(mean_p + 1e-6))


def class_balance_loss_ref(logits):
    """Pure-JAX reference for validation."""
    p = jax.nn.softmax(logits.astype(jnp.float32), axis=1)
    return -jnp.mean(jnp.log(jnp.mean(p, axis=0) + 1e-6))


if __name__ == "__main__":
    key = jax.random.PRNGKey(0)
    k0, k1 = jax.random.split(key)

    # Small shape consistent with the module: batch=16, num_classes=32.
    logits = jax.random.normal(k0, (16, 32), dtype=jnp.float32)
    ref = class_balance_loss_ref(logits)

    # Default tile (single tile / single shard, fast path).
    loss = class_balance_loss(logits)
    jax.block_until_ready(loss)
    assert jnp.allclose(loss, ref, atol=1e-3, rtol=1e-3), (loss, ref)

    # Small tile -> multi-tile / multi-shard accumulate path.
    loss_t = class_balance_loss(logits, tile_n=8)
    jax.block_until_ready(loss_t)
    assert jnp.allclose(loss_t, ref, atol=1e-3, rtol=1e-3), (loss_t, ref)

    # Ragged batch (N not a multiple of tile_n) -> masked tail + clamped
    # duplicate-tile path.
    logits2 = jax.random.normal(k1, (20, 32), dtype=jnp.float32)
    loss2 = class_balance_loss(logits2, tile_n=8)
    jax.block_until_ready(loss2)
    ref2 = class_balance_loss_ref(logits2)
    assert jnp.allclose(loss2, ref2, atol=1e-3, rtol=1e-3), (loss2, ref2)

    print("KERNEL_OK")
</pallas_src>

<mosaic_0001>
module attributes {stable_mosaic.version = 11 : i64} {
  func.func @kernel(%arg0: i32, %arg1: i32, %arg2: memref<16x32xf32, #tpu.memory_space<vmem>>, %arg3: memref<8x32xf32, #tpu.memory_space<vmem>>) attributes {dimension_semantics = [#tpu.dimension_semantics<parallel>, #tpu.dimension_semantics<arbitrary>], iteration_bounds = array<i64: 1, 1>, scalar_prefetch = 0 : i64, scratch_operands = 0 : i64, tpu.core_type = #tpu.core_type<tc>, window_params = [{transform_indices = @transform_0, window_bounds = array<i64: 16, 32>}, {transform_indices = @transform_1, window_bounds = array<i64: 8, 32>}]} {
    %c0_i32 = arith.constant 0 : i32
    %0 = arith.cmpi eq, %arg1, %c0_i32 : i32
    %1 = arith.extui %0 : i1 to i32
    %c0_i32_0 = arith.constant 0 : i32
    %2 = arith.cmpi ne, %1, %c0_i32_0 : i32
    scf.if %2 {
      %cst_8 = arith.constant 0.000000e+00 : f32
      %19 = vector.broadcast %cst_8 : f32 to vector<8x32xf32>
      %c0_9 = arith.constant 0 : index
      %c0_10 = arith.constant 0 : index
      %20 = vector.load %arg3[%c0_9, %c0_10] : memref<8x32xf32, #tpu.memory_space<vmem>>, vector<8x32xf32>
      tpu.vector_store %arg3[%c0_9, %c0_10], %19 {strides = array<i32>} : memref<8x32xf32, #tpu.memory_space<vmem>>, vector<8x32xf32>,
    } else {
    }
    %c0 = arith.constant 0 : index
    %c0_1 = arith.constant 0 : index
    %3 = vector.load %arg2[%c0, %c0_1] : memref<16x32xf32, #tpu.memory_space<vmem>>, vector<16x32xf32>
    %cst = arith.constant dense<0xFF800000> : vector<16xf32>
    %4 = vector.multi_reduction <maximumf>, %3, %cst [1] : vector<16x32xf32> to vector<16xf32>
    %5 = vector.shape_cast %4 : vector<16xf32> to vector<16x1xf32>
    %6 = vector.broadcast %5 : vector<16x1xf32> to vector<16x32xf32>
    %7 = arith.subf %3, %6 : vector<16x32xf32>
    %8 = math.exp %7 : vector<16x32xf32>
    %cst_2 = arith.constant dense<0.000000e+00> : vector<16xf32>
    %9 = vector.multi_reduction <add>, %8, %cst_2 [1] : vector<16x32xf32> to vector<16xf32>
    %10 = vector.shape_cast %9 : vector<16xf32> to vector<16x1xf32>
    %11 = tpu.reciprocal %10 {approx = true} : vector<16x1xf32> -> vector<16x1xf32>
    %12 = vector.broadcast %11 : vector<16x1xf32> to vector<16x32xf32>
    %13 = arith.mulf %8, %12 : vector<16x32xf32>
    %c0_3 = arith.constant 0 : index
    %c0_4 = arith.constant 0 : index
    %14 = vector.load %arg3[%c0_3, %c0_4] : memref<8x32xf32, #tpu.memory_space<vmem>>, vector<8x32xf32>
    %15 = vector.shape_cast %13 : vector<16x32xf32> to vector<2x8x32xf32>
    %cst_5 = arith.constant dense<0.000000e+00> : vector<8x32xf32>
    %16 = vector.multi_reduction <add>, %15, %cst_5 [0] : vector<2x8x32xf32> to vector<8x32xf32>
    %17 = arith.addf %14, %16 : vector<8x32xf32>
    %c0_6 = arith.constant 0 : index
    %c0_7 = arith.constant 0 : index
    %18 = vector.load %arg3[%c0_6, %c0_7] : memref<8x32xf32, #tpu.memory_space<vmem>>, vector<8x32xf32>
    tpu.vector_store %arg3[%c0_6, %c0_7], %17 {strides = array<i32>} : memref<8x32xf32, #tpu.memory_space<vmem>>, vector<8x32xf32>,
    return
  }
  func.func @transform_0(%arg0: i32, %arg1: i32) -> (i32, i32) {
    %c1_i32 = arith.constant 1 : i32
    %0 = arith.muli %arg0, %c1_i32 : i32
    %1 = arith.addi %0, %arg1 : i32
    %c0_i32 = arith.constant 0 : i32
    %2 = arith.minsi %1, %c0_i32 : i32
    %c0_i32_0 = arith.constant 0 : i32
    %c0_i32_1 = arith.constant 0 : i32
    return %2, %c0_i32_0 : i32, i32
  }
  func.func @transform_1(%arg0: i32, %arg1: i32) -> (i32, i32) {
    %c0_i32 = arith.constant 0 : i32
    %c0_i32_0 = arith.constant 0 : i32
    return %arg0, %c0_i32 : i32, i32
  }
}

</mosaic_0001>

<llo_original>
// kernel: tpu_custom_call.1
$region0: #{tpu_custom_call.1}
  #allocation0 [shape = 'u32[]', space=smem, size = 0x4, offset = 0x4, fixed_abs, tag = 'smem constant byte address 0x4 - core index']
  #allocation1 [shape = 'u32[144,128]{1,0:T(1,128)}', space=vmem, size = 0x12000, scoped, tag = 'internal scratch']
  %s0 = inlined_call_operand.hbm [shape: f32[16,32], index: 0, kind: input, shape index: {}]
  %s1 = inlined_call_operand.hbm [shape: f32[8,32], index: 1, kind: output, shape index: {}]
  %s2 = sld [smem:[#allocation0]]
  $region22: #{tpu_custom_call.1} parent=0
    _
  %s4 = ssub.s32 1, %s2
  %s5 = scalar_select 0, %s4, %s2
  $region1: #{tpu_custom_call.1} parent=0
    #allocation2 [shape = 'u8[8192]{0}', space=vmem, size = 0x2000, scoped, tag = 'input window, operand 0, single buffered']
    #allocation3 [shape = 's32[1]{0}', space=sflag, size = 0x4, scoped, tag = 'scoped memory for tpu_custom_call.1']
    #allocation4 [shape = 's32[1]{0}', space=sflag, size = 0x4, scoped, tag = 'scoped memory for tpu_custom_call.1']
    #allocation5 [shape = 'u8[4096]{0}', space=vmem, size = 0x1000, scoped, tag = 'output window, operand 0, single buffered']
    %6 = vsyncpa [#allocation3], 0
    %7 = vsyncpa [#allocation4], 0
    // Predicated region
    $region2: #{tpu_custom_call.1} parent=1 // pred_check
      _
    $region3: #{tpu_custom_call.1} parent=1 // pred_check_branch
      %9 = sbr.rel (0) target = $region5
    $region4: #{tpu_custom_call.1} parent=1 // pred_region
      %s10 = sadd.s32 0, 0
      %p11 = scmp.lt.s32.totalorder %s10, 0
      %s12 = scalar_select %p11, %s10, 0
      %s13 = smul.u32 2, %s12
      %s15 = ssub.s32 256, 256
      %16 = vsyncadd [#allocation3], %s15
      %s17 = smul.addr %s13, 128
      %s18 = scalar_lea.hbm %s0, %s17
      %s19 = sshll.u32 [#allocation2], 4
      %s20 = int_to_ptr.vmem [resolvable:$true] %s19
      %25 = dma.hbm_to_vmem [thread:$0]  %s18, 256, %s20, [#allocation3], 128, 128, 8
    $region5: #{tpu_custom_call.1} parent=1 // pred_fallthru
      _
    // Predicated region
    $region6: #{tpu_custom_call.1} parent=1 // pred_check
      _
    $region7: #{tpu_custom_call.1} parent=1 // pred_check_branch
      %27 = sbr.rel (0) target = $region9
    $region8: #{tpu_custom_call.1} parent=1 // pred_region
      %28 = dma.done [#allocation3], 256
    $region9: #{tpu_custom_call.1} parent=1 // pred_fallthru
      _
    %s29 = sadd.s32 0, 0
    %p30 = scmp.lt.s32.totalorder %s29, 0
    %s31 = scalar_select %p30, %s29, 0
    %s32 = smul.u32 2, %s31
    %p33 = scmp.eq.s32.totalorder 0, 0
    // Predicated region
    $region10: #{tpu_custom_call.1} parent=1 // pred_check
      %p34 = pneg %p33
    $region11: #{tpu_custom_call.1} parent=1 // pred_check_branch
      %36 = sbr.rel (%p34) target = $region13
    $region12: #{tpu_custom_call.1} parent=1 // pred_region
      %vm37 = vcmask 261120
      %38 = vst.msk [vmem:[#allocation5] sm:$0xff] %vm37, 0.0
    $region13: #{tpu_custom_call.1} parent=1 // pred_fallthru
      _
    %v39 = vld [vmem:[#allocation2] sm:$0xff]
    %v40 = vld [vmem:[#allocation2 + $0x8] sm:$0xff]
    %vm41 = vcmask 261120
    %v42 = vsel %vm41, %v39, -inf
    %43 = vmax.xlane.f32.xlu0 %v42
    %v44 = vpop.xlane.xlu0 %43
    %v45 = vsel %vm41, %v40, -inf
    %46 = vmax.xlane.f32.xlu0 %v45
    %v47 = vpop.xlane.xlu0 %46
    %v48 = vsub.f32 %v39, %v44
    %v49 = vsub.f32 %v40, %v47
    %v50 = vmul.f32 %v48, 1.442695
    %v51 = vpow.pop %v50
    %v52 = vmul.f32 %v49, 1.442695
    %v53 = vpow.pop %v52
    %v54 = vsel %vm41, %v51, 0.0
    %55 = vadd.xlane.f32.xlu0 %v54
    %v56 = vpop.xlane.xlu0 %55
    %v57 = vsel %vm41, %v53, 0.0
    %58 = vadd.xlane.f32.xlu0 %v57
    %v59 = vpop.xlane.xlu0 %58
    %v60 = vrcp.pop %v56
    %v61 = vrcp.pop %v59
    %v62 = vmul.f32 %v51, %v60
    %v63 = vmul.f32 %v53, %v61
    %v64 = vld [vmem:[#allocation5] sm:$0xff]
    %v65 = vsel %vm41, %v62, 0.0
    %v66 = vsel %vm41, %v63, 0.0
    %v67 = vadd.f32 %v65, %v66
    %v68 = vadd.f32 %v64, %v67
    %69 = vst.msk [vmem:[#allocation5] sm:$0xff] %vm41, %v68
    // Predicated region
    $region14: #{tpu_custom_call.1} parent=1 // pred_check
      _
    $region15: #{tpu_custom_call.1} parent=1 // pred_check_branch
      %71 = sbr.rel (0) target = $region17
    $region16: #{tpu_custom_call.1} parent=1 // pred_region
      %s73 = ssub.s32 128, 128
      %74 = vsyncadd [#allocation4], %s73
      %s76 = sshll.u32 [#allocation5], 4
      %s77 = int_to_ptr.vmem [resolvable:$true] %s76
      %79 = dma.vmem_to_hbm [thread:$0]  %s77, 128, %s1, [#allocation4]
    $region17: #{tpu_custom_call.1} parent=1 // pred_fallthru
      _
    // Predicated region
    $region18: #{tpu_custom_call.1} parent=1 // pred_check
      _
    $region19: #{tpu_custom_call.1} parent=1 // pred_check_branch
      %81 = sbr.rel (0) target = $region21
    $region20: #{tpu_custom_call.1} parent=1 // pred_region
      %82 = dma.done [#allocation4], 128
    $region21: #{tpu_custom_call.1} parent=1 // pred_fallthru
      _
    %83 = vsyncpa [#allocation3], 1
    %84 = vsyncpa [#allocation4], 1

</llo_original>
